<compile_context>
chip_gen: v6e
topology: v6e:2x2x1
jax: 0.10.0
libtpu: 0.0.40
codegen_flags: <defaults>
</compile_context>

<pallas_src>
import functools

import numpy as np
import jax
import jax.numpy as jnp
from jax.experimental import pallas as pl
from jax.experimental.pallas import tpu as pltpu


# ---------------------------------------------------------------------------
# Pallas kernel: token rearrange (patch_size == 1)
#   per grid step: nB slabs of (T*C, blk) -> (blk, T*C)   (lane-dense stores)
# ---------------------------------------------------------------------------
def _embed_tokens_kernel(x_ref, o_ref):
    # x_ref: (nB, TC, blk)   o_ref: (nB, blk, TC)
    # One 2-D XLU transpose per batch slab; nB is a small compile-time constant,
    # so the Python loop fully unrolls at trace time.
    for b in range(x_ref.shape[0]):
        o_ref[b] = x_ref[b].T
    # TODO(synk): for bf16/int8 inputs, pack pairs along HW into u32 with
    # pltpu.bitcast, transpose in 32-bit containers and unpack to the
    # packed-sublane layout; halves XLU transpose granules on v6e/v7x.


# ---------------------------------------------------------------------------
# attention mask: static, input-independent -> trace-time constant (no kernel)
# ---------------------------------------------------------------------------
@functools.lru_cache(maxsize=None)
def _attn_mask_np(seq_length, attn_length):
    neighbour = attn_length // 2
    idx = np.arange(seq_length)
    inside = np.abs(idx[:, None] - idx[None, :]) <= neighbour
    return np.where(inside, 0.0, 1.0).astype(np.float32)


def get_attn_mask(seq_length, attn_length):
    return jnp.asarray(_attn_mask_np(int(seq_length), int(attn_length)))


# ---------------------------------------------------------------------------
# per-chip VMEM sizing
# ---------------------------------------------------------------------------
def _vmem_caps():
    """Return (vmem_limit cap, tile budget) derived from physical VMEM."""
    try:
        phys = pltpu.get_tpu_info().vmem_capacity_bytes
    except Exception:
        phys = 64 << 20                      # conservative: v7x per-TensorCore VMEM
    limit_cap = (phys * 3) // 4              # headroom for Mosaic internal scratch
    tile_budget = min(32 << 20, limit_cap // 2)
    return limit_cap, tile_budget


# ---------------------------------------------------------------------------
# tiling chooser: lane-legal blocks, VMEM-budgeted, >= 2 parallel grid steps,
# batch folding for tiny per-batch slabs.
# ---------------------------------------------------------------------------
def _choose_tiling(B, TC, HW, itemsize, tile_budget_bytes, target_tile_bytes=4 << 20):
    def bufs_bytes(nb, blk):
        # 2 pipeline buffers x (input tile + output tile)
        return 4 * nb * TC * blk * itemsize

    # --- spatial block: full HW, or a multiple of 128 ----------------------
    if HW < 128 or bufs_bytes(1, HW) <= tile_budget_bytes:
        blk = HW
    else:
        blk = 0
        for k in range(HW // 128, 0, -1):        # largest dividing 128-multiple
            cand = 128 * k
            if HW % cand == 0 and bufs_bytes(1, cand) <= tile_budget_bytes:
                blk = cand
                break
        if blk == 0:
            # No dividing 128-multiple fits the budget: use a non-dividing
            # 128-multiple with a cdiv grid (Pallas pads the tail block; the
            # padded output lanes are discarded on write-back).
            k = max(1, tile_budget_bytes // (4 * TC * 128 * itemsize))
            blk = 128 * min(k, HW // 128)
    n_blk = pl.cdiv(HW, blk)

    # --- fold batches per step to amortize per-step overhead ---------------
    nB = 1
    for cand in range(B, 0, -1):
        if B % cand:
            continue
        if (bufs_bytes(cand, blk) <= tile_budget_bytes
                and cand * TC * blk * itemsize <= target_tile_bytes):
            nB = cand
            break

    # --- keep >= 2 grid steps when possible (2 TensorCores on v7x) ---------
    while nB > 1 and (B // nB) * n_blk < 2:
        nB -= 1
        while B % nB:
            nB -= 1
    if (B // nB) * n_blk < 2 and blk == HW and HW % 256 == 0:
        blk = HW // 2
        n_blk = 2

    return nB, blk, (B // nB, n_blk)


# ---------------------------------------------------------------------------
# EmbeddingLayer.forward
# ---------------------------------------------------------------------------
def embedding_layer_forward(x, *, seq_length, attn_length, c_input, patch_size,
                            embedding_dim=None, vmem_budget_bytes=None):
    B, T, C, H, W = x.shape
    assert T == seq_length, 'context size is not equal to seq_length'
    assert C == c_input, 'feature size is not equal to c_input'
    assert H % patch_size == 0, 'height is not divisible by patch_size'
    assert W % patch_size == 0, 'width is not divisible by patch_size'

    attn_mask = get_attn_mask(T, attn_length)

    if patch_size != 1:
        # TODO(synk): patch_size > 1 needs (ps, ps) sub-(8,128) interleaved tiles;
        # no clean Pallas tiling, so fall back to pure JAX for that path.
        ps = patch_size
        pnh, pnw = H // ps, W // ps
        xt = x.reshape(B, T, C, pnh, ps, pnw, ps)
        xt = jnp.transpose(xt, (0, 3, 5, 1, 2, 4, 6))
        tokens = xt.reshape(B * pnh * pnw, T, C * ps * ps)
        return tokens, attn_mask

    TC = T * C
    HW = H * W
    itemsize = x.dtype.itemsize

    limit_cap, default_budget = _vmem_caps()
    tile_budget = default_budget if vmem_budget_bytes is None else vmem_budget_bytes

    nB, blk, grid = _choose_tiling(B, TC, HW, itemsize, tile_budget)

    bufs_bytes = 4 * nB * TC * blk * itemsize           # 2 bufs x (in + out) tiles
    vmem_limit = int(min(limit_cap, max(16 << 20, bufs_bytes + (4 << 20))))

    x2 = x.reshape(B, TC, HW)                            # contiguous reshape -> free

    out = pl.pallas_call(
        _embed_tokens_kernel,
        out_shape=jax.ShapeDtypeStruct((B, HW, TC), x.dtype),
        grid_spec=pltpu.PrefetchScalarGridSpec(
            num_scalar_prefetch=0,
            grid=grid,
            in_specs=[pl.BlockSpec((nB, TC, blk), lambda b, s: (b, 0, s))],
            out_specs=pl.BlockSpec((nB, blk, TC), lambda b, s: (b, s, 0)),
        ),
        compiler_params=pltpu.CompilerParams(
            dimension_semantics=("parallel", "parallel"),
            vmem_limit_bytes=vmem_limit,
        ),
        cost_estimate=pl.CostEstimate(
            flops=0, transcendentals=0,
            bytes_accessed=2 * B * TC * HW * itemsize),
    )(x2)

    tokens = out.reshape(B * HW, T, C)                   # contiguous reshape -> free
    return tokens, attn_mask


# ---------------------------------------------------------------------------
# demo / self-check
# ---------------------------------------------------------------------------
if __name__ == "__main__":
    # shapes consistent with the module: batch=2, context(seq)=8, c_input=32,
    # spatial 8x8, patch_size=1 (embedding_dim = c_input * ps^2 = 32), attn_length=3
    B, T, C, H, W = 2, 8, 32, 8, 8
    attn_length, patch_size = 3, 1

    key = jax.random.PRNGKey(0)
    x = jax.random.normal(key, (B, T, C, H, W), jnp.float32)

    tokens, attn_mask = embedding_layer_forward(
        x, seq_length=T, attn_length=attn_length, c_input=C,
        patch_size=patch_size, embedding_dim=C * patch_size * patch_size)
    tokens, attn_mask = jax.block_until_ready((tokens, attn_mask))

    # pure-JAX / numpy reference check (exact: data movement only)
    ref_tokens = jnp.transpose(x, (0, 3, 4, 1, 2)).reshape(B * H * W, T, C)
    nb = attn_length // 2
    ref_mask = np.ones((T, T), np.float32)
    for i in range(T):
        ref_mask[i, max(0, i - nb):min(T, i + nb + 1)] = 0
        ref_mask[max(0, i - nb):min(T, i + nb + 1), i] = 0

    assert tokens.shape == (B * H * W, T, C) and tokens.dtype == x.dtype
    assert attn_mask.shape == (T, T) and attn_mask.dtype == jnp.float32
    assert bool(jnp.array_equal(tokens, ref_tokens))
    assert np.array_equal(np.asarray(attn_mask), ref_mask)
    print("KERNEL_OK")
</pallas_src>

<mosaic_0001>
module attributes {stable_mosaic.version = 11 : i64} {
  func.func @_embed_tokens_kernel(%arg0: i32, %arg1: i32, %arg2: memref<1x256x64xf32, #tpu.memory_space<vmem>>, %arg3: memref<1x64x256xf32, #tpu.memory_space<vmem>>) attributes {dimension_semantics = [#tpu.dimension_semantics<parallel>, #tpu.dimension_semantics<parallel>], iteration_bounds = array<i64: 2, 1>, scalar_prefetch = 0 : i64, scratch_operands = 0 : i64, tpu.core_type = #tpu.core_type<tc>, window_params = [{transform_indices = @transform_0, window_bounds = array<i64: 1, 256, 64>}, {transform_indices = @transform_1, window_bounds = array<i64: 1, 64, 256>}]} {
    %c0 = arith.constant 0 : index
    %c0_0 = arith.constant 0 : index
    %c0_1 = arith.constant 0 : index
    %0 = vector.load %arg2[%c0, %c0_0, %c0_1] : memref<1x256x64xf32, #tpu.memory_space<vmem>>, vector<1x256x64xf32>
    %1 = vector.shape_cast %0 : vector<1x256x64xf32> to vector<256x64xf32>
    %2 = tpu.transpose %1, [1, 0] : vector<256x64xf32> -> vector<64x256xf32>
    %c0_2 = arith.constant 0 : index
    %c0_3 = arith.constant 0 : index
    %c0_4 = arith.constant 0 : index
    %3 = vector.load %arg3[%c0_2, %c0_3, %c0_4] : memref<1x64x256xf32, #tpu.memory_space<vmem>>, vector<1x64x256xf32>
    %4 = vector.shape_cast %3 : vector<1x64x256xf32> to vector<64x256xf32>
    %5 = vector.shape_cast %2 : vector<64x256xf32> to vector<1x64x256xf32>
    tpu.vector_store %arg3[%c0_2, %c0_3, %c0_4], %5 {strides = array<i32>} : memref<1x64x256xf32, #tpu.memory_space<vmem>>, vector<1x64x256xf32>,
    return
  }
  func.func @transform_0(%arg0: i32, %arg1: i32) -> (i32, i32, i32) {
    %c0_i32 = arith.constant 0 : i32
    %c0_i32_0 = arith.constant 0 : i32
    return %arg0, %c0_i32, %arg1 : i32, i32, i32
  }
  func.func @transform_1(%arg0: i32, %arg1: i32) -> (i32, i32, i32) {
    %c0_i32 = arith.constant 0 : i32
    %c0_i32_0 = arith.constant 0 : i32
    return %arg0, %arg1, %c0_i32 : i32, i32, i32
  }
}

</mosaic_0001>

<llo_original>
// kernel: tpu_custom_call.1
$region0: #{tpu_custom_call.1}
  #allocation0 [shape = 'u32[]', space=smem, size = 0x4, offset = 0x4, fixed_abs, tag = 'smem constant byte address 0x4 - core index']
  #allocation1 [shape = 'u32[144,128]{1,0:T(1,128)}', space=vmem, size = 0x12000, scoped, tag = 'internal scratch']
  %s0 = inlined_call_operand.vmem [shape: f32[2,256,64], index: 0, kind: input, shape index: {}]
  %s1 = inlined_call_operand.hbm [shape: f32[2,64,256], index: 1, kind: output, shape index: {}]
  %s2 = sld [smem:[#allocation0]]
  $region37: #{tpu_custom_call.1} parent=0
    _
  %s4 = ssub.s32 1, %s2
  %s5 = scalar_select 0, %s4, %s2
  $region1: #{tpu_custom_call.1} parent=0
    #allocation2 [shape = 'u8[131072]{0}', space=vmem, size = 0x20000, scoped, tag = 'output window, operand 0']
    #allocation3 [shape = 's32[2]{0}', space=sflag, size = 0x8, scoped, tag = 'scoped memory for tpu_custom_call.1']
    %6 = vsyncpa [#allocation3], 0
    %s7 = scalar_lea.sflag [#allocation3], 1
    %8 = vsyncpa %s7, 0
    loop: start=0, step=1, limit=4
    $region2: #{tpu_custom_call.1} parent=1 // loop_pre_header
      _
    $region3: #{tpu_custom_call.1} parent=1 // loop_header
      %s10 = sphi 0, %s14
      %p11 = scmp.ge.s32.totalorder %s10, 4
      %s17 = sphi 0, %s29
      %s18 = sphi 0, %s25
      %s19 = sphi 0, %s17
      %s20 = sphi 0, %s18
      %s21 = sphi 0, %s19
      %s22 = sphi 0, %s20
      %s34 = sphi 0, %s36
      %s37 = sphi 0, %s34
      %s38 = sphi 0, %s37
      %s54 = sphi 0, %s38
      %s62 = sphi 0, %s64
      %s65 = sphi 0, %s62
      %s66 = sphi 0, %s65
      %s82 = sphi 0, %s66
    $region4: #{tpu_custom_call.1} parent=1 // loop_header_branch
      %13 = sbr.rel (%p11) target = $region8
    $region5: #{tpu_custom_call.1} parent=1 // loop_body
      %s15 = ssub.s32 %s10, 1
      %s16 = ssub.s32 %s10, 2
      %s23 = sadd.s32 1, %s18
      %p24 = scmp.ge.s32.totalorder %s23, 1
      %s25 = scalar_select %p24, 0, %s23
      %s26 = sadd.s32 1, %s17
      %s27 = scalar_select %p24, %s26, %s17
      %p28 = scmp.ge.s32.totalorder %s27, 2
      %s29 = scalar_select %p28, 0, %s27
      %s30 = ssub.s32 %s17, %s29
      %s31 = ssub.s32 %s18, %s25
      %s32 = sor.u32 %s30, %s31
      %p33 = scmp.eq.s32.totalorder %s32, 0
      %s35 = sadd.s32 %s34, 1
      %s36 = scalar_select %p33, %s34, %s35
      %p39 = pneg %p33
      %p40 = scmp.eq.s32.totalorder %s10, 1
      %p41 = por %p39, %p40
      %p42 = scmp.ne.s32.totalorder %s34, %s37
      %p43 = scmp.eq.s32.totalorder %s10, 0
      %p44 = por %p42, %p43
      %p45 = scmp.ne.s32.totalorder %s34, %s37
      %p46 = scmp.eq.s32.totalorder %s15, 1
      %p47 = por %p45, %p46
      %p48 = scmp.ne.s32.totalorder %s37, %s38
      %p49 = scmp.eq.s32.totalorder %s15, 0
      %p50 = por %p48, %p49
      %p51 = scmp.ne.s32.totalorder %s37, %s38
      %p52 = scmp.eq.s32.totalorder %s16, 1
      %p53 = por %p51, %p52
      %p55 = scmp.ne.s32.totalorder %s38, %s54
      %p56 = scmp.eq.s32.totalorder %s16, 0
      %p57 = por %p55, %p56
      %s58 = ssub.s32 %s17, %s29
      %s59 = ssub.s32 %s18, %s25
      %s60 = sor.u32 %s58, %s59
      %p61 = scmp.eq.s32.totalorder %s60, 0
      %s63 = sadd.s32 %s62, 1
      %s64 = scalar_select %p61, %s62, %s63
      %p67 = pneg %p61
      %p68 = scmp.eq.s32.totalorder %s10, 1
      %p69 = por %p67, %p68
      %p70 = scmp.ne.s32.totalorder %s62, %s65
      %p71 = scmp.eq.s32.totalorder %s10, 0
      %p72 = por %p70, %p71
      %p73 = scmp.ne.s32.totalorder %s62, %s65
      %p74 = scmp.eq.s32.totalorder %s15, 1
      %p75 = por %p73, %p74
      %p76 = scmp.ne.s32.totalorder %s65, %s66
      %p77 = scmp.eq.s32.totalorder %s15, 0
      %p78 = por %p76, %p77
      %p79 = scmp.ne.s32.totalorder %s65, %s66
      %p80 = scmp.eq.s32.totalorder %s16, 1
      %p81 = por %p79, %p80
      %p83 = scmp.ne.s32.totalorder %s66, %s82
      %p84 = scmp.eq.s32.totalorder %s16, 0
      %p85 = por %p83, %p84
      %p86 = scmp.le.s32.totalorder 1, %s10
      %p87 = scmp.lt.s32.totalorder %s10, 3
      %p88 = pnand %p86, %p87
      %p89 = pneg %p88
      // Predicated region
      $region9: #{tpu_custom_call.1} parent=5 // pred_check
        _
      $region10: #{tpu_custom_call.1} parent=5 // pred_check_branch
        %91 = sbr.rel (%p88) target = $region12
      $region11: #{tpu_custom_call.1} parent=5 // pred_region
        %s92 = ssub.s32 %s10, 1
      $region12: #{tpu_custom_call.1} parent=5 // pred_fallthru
        _
      %p93 = scmp.lt.s32.totalorder %s10, 2
      // Predicated region
      $region13: #{tpu_custom_call.1} parent=5 // pred_check
        %p94 = pneg %p93
      $region14: #{tpu_custom_call.1} parent=5 // pred_check_branch
        %96 = sbr.rel (%p94) target = $region16
      $region15: #{tpu_custom_call.1} parent=5 // pred_region
        // Predicated region
        $region17: #{tpu_custom_call.1} parent=15 // pred_check
          %p97 = pneg %p44
        $region18: #{tpu_custom_call.1} parent=15 // pred_check_branch
          %99 = sbr.rel (%p97) target = $region20
        $region19: #{tpu_custom_call.1} parent=15 // pred_region
          %p100 = scmp.lt.s32.totalorder %s17, 1
          %s101 = scalar_select %p100, %s17, 1
          %p102 = scmp.lt.s32.totalorder %s18, 0
          %s103 = scalar_select %p102, %s18, 0
          %s104 = smul.addr %s101, 32
          %s105 = sadd.s32 %s103, %s104
          %s106 = smul.addr %s105, 8
          %s107 = scalar_lea.vmem %s0, %s106
        $region20: #{tpu_custom_call.1} parent=15 // pred_fallthru
          _
      $region16: #{tpu_custom_call.1} parent=5 // pred_fallthru
        _
      %p108 = scmp.le.s32.totalorder 1, %s10
      %p109 = scmp.lt.s32.totalorder %s10, 3
      %p110 = pnand %p108, %p109
      %p111 = pneg %p110
      // Predicated region
      $region21: #{tpu_custom_call.1} parent=5 // pred_check
        _
      $region22: #{tpu_custom_call.1} parent=5 // pred_check_branch
        %113 = sbr.rel (%p110) target = $region24
      $region23: #{tpu_custom_call.1} parent=5 // pred_region
        %s114 = ssub.s32 %s10, 1
        %p115 = scmp.lt.s32.totalorder %s19, 1
        %s116 = scalar_select %p115, %s19, 1
        %p117 = scmp.lt.s32.totalorder %s20, 0
        %s118 = scalar_select %p117, %s20, 0
        %s119 = smul.addr %s116, 32
        %s120 = sadd.s32 %s118, %s119
        %s121 = smul.addr %s120, 8
        %s122 = scalar_lea.vmem %s0, %s121
        %p123 = pneg %p50
        %p124 = pneg %p47
        %p125 = pneg %p78
        %p126 = pneg %p75
        %s127 = sand.u32 %s65, 1
        %s128 = scalar_lea.sflag [#allocation3], %s127
        %s129 = sand.u32 %s65, 1
        %s130 = smul.addr %s129, 128
        %s131 = scalar_lea.vmem [#allocation2], %s130
        %p132 = scmp.lt.s32.totalorder %s19, 1
        %s133 = scalar_select %p132, %s19, 1
        %p134 = scmp.lt.s32.totalorder %s20, 0
        %s135 = scalar_select %p134, %s20, 0
        %s136 = smul.addr %s133, 32
        %s137 = sadd.s32 %s135, %s136
        %s138 = smul.addr %s137, 8
        %s139 = scalar_lea.vmem %s0, %s138
        %s140 = smul.u32 8, %s20
        %v141 = vld [vmem:[%s139] sm:$0xff]
        %v142 = vld [vmem:[%s139 + $0x8] sm:$0xff]
        %v143 = vld [vmem:[%s139 + $0x10] sm:$0xff]
        %v144 = vld [vmem:[%s139 + $0x18] sm:$0xff]
        %v145 = vld [vmem:[%s139 + $0x20] sm:$0xff]
        %v146 = vld [vmem:[%s139 + $0x28] sm:$0xff]
        %v147 = vld [vmem:[%s139 + $0x30] sm:$0xff]
        %v148 = vld [vmem:[%s139 + $0x38] sm:$0xff]
        %v149 = vld [vmem:[%s139 + $0x40] sm:$0xff]
        %v150 = vld [vmem:[%s139 + $0x48] sm:$0xff]
        %v151 = vld [vmem:[%s139 + $0x50] sm:$0xff]
        %v152 = vld [vmem:[%s139 + $0x58] sm:$0xff]
        %v153 = vld [vmem:[%s139 + $0x60] sm:$0xff]
        %v154 = vld [vmem:[%s139 + $0x68] sm:$0xff]
        %v155 = vld [vmem:[%s139 + $0x70] sm:$0xff]
        %v156 = vld [vmem:[%s139 + $0x78] sm:$0xff]
        %v157 = vld [vmem:[%s139 + $0x80] sm:$0xff]
        %v158 = vld [vmem:[%s139 + $0x88] sm:$0xff]
        %v159 = vld [vmem:[%s139 + $0x90] sm:$0xff]
        %v160 = vld [vmem:[%s139 + $0x98] sm:$0xff]
        %v161 = vld [vmem:[%s139 + $0xa0] sm:$0xff]
        %v162 = vld [vmem:[%s139 + $0xa8] sm:$0xff]
        %v163 = vld [vmem:[%s139 + $0xb0] sm:$0xff]
        %v164 = vld [vmem:[%s139 + $0xb8] sm:$0xff]
        %v165 = vld [vmem:[%s139 + $0xc0] sm:$0xff]
        %v166 = vld [vmem:[%s139 + $0xc8] sm:$0xff]
        %v167 = vld [vmem:[%s139 + $0xd0] sm:$0xff]
        %v168 = vld [vmem:[%s139 + $0xd8] sm:$0xff]
        %v169 = vld [vmem:[%s139 + $0xe0] sm:$0xff]
        %v170 = vld [vmem:[%s139 + $0xe8] sm:$0xff]
        %v171 = vld [vmem:[%s139 + $0xf0] sm:$0xff]
        %v172 = vld [vmem:[%s139 + $0xf8] sm:$0xff]
        %173 = vxpose.xlu0.b32.start [1/16] %v141, 128
        %174 = vxpose.xlu0.b32.cont [2/16] %v142, 128
        %175 = vxpose.xlu0.b32.cont [3/16] %v143, 128
        %176 = vxpose.xlu0.b32.cont [4/16] %v144, 128
        %177 = vxpose.xlu0.b32.cont [5/16] %v145, 128
        %178 = vxpose.xlu0.b32.cont [6/16] %v146, 128
        %179 = vxpose.xlu0.b32.cont [7/16] %v147, 128
        %180 = vxpose.xlu0.b32.cont [8/16] %v148, 128
        %181 = vxpose.xlu0.b32.cont [9/16] %v149, 128
        %182 = vxpose.xlu0.b32.cont [10/16] %v150, 128
        %183 = vxpose.xlu0.b32.cont [11/16] %v151, 128
        %184 = vxpose.xlu0.b32.cont [12/16] %v152, 128
        %185 = vxpose.xlu0.b32.cont [13/16] %v153, 128
        %186 = vxpose.xlu0.b32.cont [14/16] %v154, 128
        %187 = vxpose.xlu0.b32.cont [15/16] %v155, 128
        %188 = vxpose.xlu0.b32.end [16/16] %v156, 128
        %v189 = vpop.trf.xlu0
        %v190 = vpop.trf.xlu0
        %v191 = vpop.trf.xlu0
        %v192 = vpop.trf.xlu0
        %v193 = vpop.trf.xlu0
        %v194 = vpop.trf.xlu0
        %v195 = vpop.trf.xlu0
        %v196 = vpop.trf.xlu0
        %v197 = vpop.trf.xlu0
        %v198 = vpop.trf.xlu0
        %v199 = vpop.trf.xlu0
        %v200 = vpop.trf.xlu0
        %v201 = vpop.trf.xlu0
        %v202 = vpop.trf.xlu0
        %v203 = vpop.trf.xlu0
        %v204 = vpop.trf.xlu0
        %205 = vxpose.xlu0.b32.start [1/16] %v157, 128
        %206 = vxpose.xlu0.b32.cont [2/16] %v158, 128
        %207 = vxpose.xlu0.b32.cont [3/16] %v159, 128
        %208 = vxpose.xlu0.b32.cont [4/16] %v160, 128
        %209 = vxpose.xlu0.b32.cont [5/16] %v161, 128
        %210 = vxpose.xlu0.b32.cont [6/16] %v162, 128
        %211 = vxpose.xlu0.b32.cont [7/16] %v163, 128
        %212 = vxpose.xlu0.b32.cont [8/16] %v164, 128
        %213 = vxpose.xlu0.b32.cont [9/16] %v165, 128
        %214 = vxpose.xlu0.b32.cont [10/16] %v166, 128
        %215 = vxpose.xlu0.b32.cont [11/16] %v167, 128
        %216 = vxpose.xlu0.b32.cont [12/16] %v168, 128
        %217 = vxpose.xlu0.b32.cont [13/16] %v169, 128
        %218 = vxpose.xlu0.b32.cont [14/16] %v170, 128
        %219 = vxpose.xlu0.b32.cont [15/16] %v171, 128
        %220 = vxpose.xlu0.b32.end [16/16] %v172, 128
        %v221 = vpop.trf.xlu0
        %v222 = vpop.trf.xlu0
        %v223 = vpop.trf.xlu0
        %v224 = vpop.trf.xlu0
        %v225 = vpop.trf.xlu0
        %v226 = vpop.trf.xlu0
        %v227 = vpop.trf.xlu0
        %v228 = vpop.trf.xlu0
        %v229 = vpop.trf.xlu0
        %v230 = vpop.trf.xlu0
        %v231 = vpop.trf.xlu0
        %v232 = vpop.trf.xlu0
        %v233 = vpop.trf.xlu0
        %v234 = vpop.trf.xlu0
        %v235 = vpop.trf.xlu0
        %v236 = vpop.trf.xlu0
        %237 = vst [vmem:[%s131] sm:$0xff] %v189
        %238 = vst [vmem:[%s131 + $0x8] sm:$0xff] %v221
        %239 = vst [vmem:[%s131 + $0x10] sm:$0xff] %v190
        %240 = vst [vmem:[%s131 + $0x18] sm:$0xff] %v222
        %241 = vst [vmem:[%s131 + $0x20] sm:$0xff] %v191
        %242 = vst [vmem:[%s131 + $0x28] sm:$0xff] %v223
        %243 = vst [vmem:[%s131 + $0x30] sm:$0xff] %v192
        %244 = vst [vmem:[%s131 + $0x38] sm:$0xff] %v224
        %245 = vst [vmem:[%s131 + $0x40] sm:$0xff] %v193
        %246 = vst [vmem:[%s131 + $0x48] sm:$0xff] %v225
        %247 = vst [vmem:[%s131 + $0x50] sm:$0xff] %v194
        %248 = vst [vmem:[%s131 + $0x58] sm:$0xff] %v226
        %249 = vst [vmem:[%s131 + $0x60] sm:$0xff] %v195
        %250 = vst [vmem:[%s131 + $0x68] sm:$0xff] %v227
        %251 = vst [vmem:[%s131 + $0x70] sm:$0xff] %v196
        %252 = vst [vmem:[%s131 + $0x78] sm:$0xff] %v228
        %s253 = sand.u32 %s65, 1
        %s254 = scalar_lea.sflag [#allocation3], %s253
        %s255 = sand.u32 %s65, 1
        %s256 = smul.addr %s255, 128
        %s257 = scalar_lea.vmem [#allocation2], %s256
        // Predicated region
        $region25: #{tpu_custom_call.1} parent=23 // pred_check
          %p258 = pneg %p75
        $region26: #{tpu_custom_call.1} parent=23 // pred_check_branch
          %260 = sbr.rel (%p258) target = $region28
        $region27: #{tpu_custom_call.1} parent=23 // pred_region
          %s261 = smul.u32 8, %s20
          %s263 = ssub.s32 2048, 2048
          %264 = vsyncadd %s254, %s263
          %s265 = smul.addr %s261, 2
          %s266 = smul.addr %s19, 16
          %s267 = sadd.s32 %s265, %s266
          %s268 = smul.addr %s267, 128
          %s269 = scalar_lea.hbm %s1, %s268
          %s270 = sshll.u32 %s257, 4
          %s271 = int_to_ptr.vmem [resolvable:$true] %s270
          %276 = dma.vmem_to_hbm [thread:$0]  %s271, 2048, %s269, %s254, 256, 256, 16
        $region28: #{tpu_custom_call.1} parent=23 // pred_fallthru
          _
      $region24: #{tpu_custom_call.1} parent=5 // pred_fallthru
        _
      %p277 = scmp.le.s32.totalorder 2, %s10
      // Predicated region
      $region29: #{tpu_custom_call.1} parent=5 // pred_check
        %p278 = pneg %p277
      $region30: #{tpu_custom_call.1} parent=5 // pred_check_branch
        %280 = sbr.rel (%p278) target = $region32
      $region31: #{tpu_custom_call.1} parent=5 // pred_region
        %s281 = ssub.s32 %s10, 2
        // Predicated region
        $region33: #{tpu_custom_call.1} parent=31 // pred_check
          %p282 = pneg %p81
        $region34: #{tpu_custom_call.1} parent=31 // pred_check_branch
          %284 = sbr.rel (%p282) target = $region36
        $region35: #{tpu_custom_call.1} parent=31 // pred_region
          %s285 = sand.u32 %s66, 1
          %s286 = scalar_lea.sflag [#allocation3], %s285
          %s287 = sand.u32 %s66, 1
          %s288 = smul.addr %s287, 128
          %s289 = scalar_lea.vmem [#allocation2], %s288
          %290 = dma.done %s286, 2048
        $region36: #{tpu_custom_call.1} parent=31 // pred_fallthru
          _
      $region32: #{tpu_custom_call.1} parent=5 // pred_fallthru
        _
    $region6: #{tpu_custom_call.1} parent=1 // loop_footer
      %s14 = sadd.s32 1, %s10
    $region7: #{tpu_custom_call.1} parent=1 // loop_footer_branch
      %9 = sbr.rel target = $region3
    $region8: #{tpu_custom_call.1} parent=1 // loop_exit
      _
    %291 = vsyncpa [#allocation3], 1
    %s292 = scalar_lea.sflag [#allocation3], 1
    %293 = vsyncpa %s292, 1

</llo_original>
